<compile_context>
chip_gen: v6e
topology: v6e:2x2x1
jax: 0.10.0
libtpu: 0.0.40
codegen_flags: <defaults>
</compile_context>

<pallas_src>
import numpy as np
import jax
import jax.numpy as jnp
from jax.experimental import pallas as pl
from jax.experimental.pallas import tpu as pltpu

HID = 32          # hidden_dim
EMB = 8           # embedding_dim
MAZE = (64, 64)   # maze_size
NUM_T = 10        # num_treasures
EPS = 1e-5        # nn.LayerNorm default eps


# ------------------------------- kernel ------------------------------------ #

def shared_base_kernel(pos_ref, img_ref, wc_ref, bc_ref, gc_ref, bec_ref,
                       dt_ref, wdt_ref, bdt_ref, gdt_ref, bedt_ref, o_ref):
    """Fused SharedBase forward for one batch block.

    pos_ref : (bb, 16)       f32   position embeddings (pass-through)
    img_ref : (bb, 144)      bf16  zero-padded images, flattened c*36+r*6+s
    wc_ref  : (144, 512)     bf16  conv folded to a linear map, cols = dw*128 + h*4 + w
    bc_ref  : (1, 128)       f32   conv bias repeated per pool window (h*4+w order)
    gc_ref  : (1, 128)       f32   LayerNorm(cnn) gamma   (flatten order h*4+w)
    bec_ref : (1, 128)       f32   LayerNorm(cnn) beta
    dt_ref  : (bb, 21)       bf16  [end_dist | treasure_dist | treasure_status]
    wdt_ref : (21, 64)       bf16  block-diag [fc_dist_w ; fc_treasure_w]
    bdt_ref : (1, 64)        f32   concatenated biases
    gdt_ref : (1, 64)        f32   concatenated LN gammas
    bedt_ref: (1, 64)        f32   concatenated LN betas
    o_ref   : (bb, 208)      f32   [pos(16) | cnn(128) | dist(32) | treasure(32)]
    """
    f32 = jnp.float32
    h4 = bc_ref.shape[1]                      # 4*H = 128 pooled feature width

    # ---- conv branch: conv-as-matmul -> maxpool -> bias+ReLU -> LayerNorm ----
    conv = jnp.dot(img_ref[...], wc_ref[...], preferred_element_type=f32)
    pooled = jnp.maximum(
        jnp.maximum(conv[:, 0 * h4:1 * h4], conv[:, 1 * h4:2 * h4]),
        jnp.maximum(conv[:, 2 * h4:3 * h4], conv[:, 3 * h4:4 * h4]))
    # bias is constant across a pool window and ReLU is monotone, so
    # max(relu(x+b)) == relu(max(x)+b): apply both after pooling.
    pooled = jnp.maximum(pooled + bc_ref[...], 0.0)
    mean = jnp.mean(pooled, axis=-1, keepdims=True)
    var = jnp.mean(jnp.square(pooled - mean), axis=-1, keepdims=True)
    feat = (pooled - mean) * jax.lax.rsqrt(var + EPS)
    feat = feat * gc_ref[...] + bec_ref[...]

    # ---- fused dist / treasure-status branch (block-diagonal matmul) ----
    h = jnp.dot(dt_ref[...], wdt_ref[...], preferred_element_type=f32)
    h = jnp.maximum(h + bdt_ref[...], 0.0)
    hh = wdt_ref.shape[1] // 2

    def _ln(z):
        m = jnp.mean(z, axis=-1, keepdims=True)
        v = jnp.mean(jnp.square(z - m), axis=-1, keepdims=True)
        return (z - m) * jax.lax.rsqrt(v + EPS)

    gdt = gdt_ref[...]
    bedt = bedt_ref[...]

    # ---- concatenate inside the kernel via lane-offset stores ----
    npos = pos_ref.shape[1]
    base = npos + h4
    o_ref[:, :npos] = pos_ref[...]
    o_ref[:, npos:base] = feat
    o_ref[:, base:base + hh] = _ln(h[:, :hh]) * gdt[:, :hh] + bedt[:, :hh]
    o_ref[:, base + hh:] = _ln(h[:, hh:]) * gdt[:, hh:] + bedt[:, hh:]


# --------------------------- kernel wrapper -------------------------------- #

def _batch_block(B):
    """Largest batch block (multiple of 8) that divides B, else B itself."""
    for cand in (512, 256, 128, 64, 32, 16, 8):
        if B % cand == 0:
            return cand
    return B


def fused_forward(pos_emb, img, wc, bc, gc, bec, dt, wdt, bdt, gdt, bedt):
    B = pos_emb.shape[0]
    out_dim = pos_emb.shape[1] + bc.shape[1] + wdt.shape[1]
    bb = _batch_block(B)

    def rows(n):
        return pl.BlockSpec((bb, n), lambda i: (i, 0))

    def whole(a):
        return pl.BlockSpec(a.shape, lambda i: (0, 0))

    return pl.pallas_call(
        shared_base_kernel,
        out_shape=jax.ShapeDtypeStruct((B, out_dim), jnp.float32),
        grid=(pl.cdiv(B, bb),),
        in_specs=[rows(pos_emb.shape[1]), rows(img.shape[1]),
                  whole(wc), whole(bc), whole(gc), whole(bec),
                  rows(dt.shape[1]), whole(wdt), whole(bdt), whole(gdt),
                  whole(bedt)],
        out_specs=rows(out_dim),
        compiler_params=pltpu.CompilerParams(
            dimension_semantics=("parallel",)),
    )(pos_emb, img, wc, bc, gc, bec, dt, wdt, bdt, gdt, bedt)


# ---------------------- offline weight packing ------------------------------ #

def _conv_as_matrix(conv_w):
    """Fold Conv2d(4->H, 3x3, pad=1) on a 4x4 input into a (144, 4*4H) matrix.

    Rows index the zero-padded (6x6) image flattened as c*36 + r*6 + s.
    Columns are ordered dw*(4H) + h*4 + w, where w = pool-window index
    (row-major over the 2x2 pooled grid) and dw = position inside that 2x2
    pool window, so a max over the four 128-wide column groups yields pooled
    features already in PyTorch Flatten(-3) order (h*4 + w).
    """
    w = np.asarray(conv_w, np.float32)          # (H, 4, 3, 3)
    H = w.shape[0]
    mat = np.zeros((4 * 6 * 6, 4 * 4 * H), np.float32)
    hcols = np.arange(H) * 4
    for pi in range(2):
        for pj in range(2):
            for di in range(2):
                for dj in range(2):
                    oi, oj = 2 * pi + di, 2 * pj + dj
                    widx, dw = pi * 2 + pj, di * 2 + dj
                    cols = dw * 4 * H + hcols + widx
                    for c in range(4):
                        for ki in range(3):
                            for kj in range(3):
                                row = c * 36 + (oi + ki) * 6 + (oj + kj)
                                mat[row, cols] = w[:, c, ki, kj]
    return mat


def prepare_params(params):
    """One-time packing of module parameters into kernel-ready matrices."""
    H = params["conv_w"].shape[0]
    prep = {"x_emb": params["x_emb"], "y_emb": params["y_emb"]}
    prep["conv_mat"] = jnp.asarray(_conv_as_matrix(params["conv_w"]),
                                   jnp.bfloat16)
    prep["conv_b"] = jnp.repeat(params["conv_b"], 4).reshape(1, 4 * H)
    prep["ln_cnn_g"] = params["ln_cnn_g"].reshape(1, 4 * H)
    prep["ln_cnn_b"] = params["ln_cnn_b"].reshape(1, 4 * H)

    wdt = np.zeros((11 + NUM_T, 2 * H), np.float32)   # block-diagonal fuse
    wdt[:11, :H] = np.asarray(params["fc_dist_w"], np.float32)
    wdt[11:, H:] = np.asarray(params["fc_ts_w"], np.float32)
    prep["fc_dt_w"] = jnp.asarray(wdt, jnp.bfloat16)
    prep["fc_dt_b"] = jnp.concatenate(
        [params["fc_dist_b"], params["fc_ts_b"]]).reshape(1, 2 * H)
    prep["ln_dt_g"] = jnp.concatenate(
        [params["ln_dist_g"], params["ln_ts_g"]]).reshape(1, 2 * H)
    prep["ln_dt_b"] = jnp.concatenate(
        [params["ln_dist_b"], params["ln_ts_b"]]).reshape(1, 2 * H)
    return prep


# ------------------------------ JAX glue ------------------------------------ #

def init_params(key, hidden_dim=HID):
    ks = jax.random.split(key, 8)
    p = {}
    p["x_emb"] = jax.random.normal(ks[0], (MAZE[0], EMB), jnp.float32)
    p["y_emb"] = jax.random.normal(ks[1], (MAZE[1], EMB), jnp.float32)
    p["conv_w"] = jax.random.normal(ks[2], (hidden_dim, 4, 3, 3), jnp.float32) * 0.1
    p["conv_b"] = jax.random.normal(ks[3], (hidden_dim,), jnp.float32) * 0.01
    p["ln_cnn_g"] = jnp.ones((hidden_dim * 4,), jnp.float32)
    p["ln_cnn_b"] = jnp.zeros((hidden_dim * 4,), jnp.float32)
    p["fc_dist_w"] = jax.random.normal(ks[4], (11, hidden_dim), jnp.float32) * 0.1
    p["fc_dist_b"] = jax.random.normal(ks[5], (hidden_dim,), jnp.float32) * 0.01
    p["fc_ts_w"] = jax.random.normal(ks[6], (NUM_T, hidden_dim), jnp.float32) * 0.1
    p["fc_ts_b"] = jax.random.normal(ks[7], (hidden_dim,), jnp.float32) * 0.01
    p["ln_dist_g"] = jnp.ones((hidden_dim,), jnp.float32)
    p["ln_dist_b"] = jnp.zeros((hidden_dim,), jnp.float32)
    p["ln_ts_g"] = jnp.ones((hidden_dim,), jnp.float32)
    p["ln_ts_b"] = jnp.zeros((hidden_dim,), jnp.float32)
    return p


@jax.jit
def shared_base_forward(prep, x, y, end_dist, treasure_dist, images,
                        treasure_status):
    B = x.shape[0]
    # Embedding lookups kept as XLA gathers (not worth a kernel at this scale).
    x_emb = jnp.take(prep["x_emb"], x, axis=0).reshape(B, -1)
    y_emb = jnp.take(prep["y_emb"], y, axis=0).reshape(B, -1)
    pos_emb = jnp.concatenate([x_emb, y_emb], axis=-1).astype(jnp.float32)

    # Pad once, flatten: one contiguous load for the kernel (no im2col glue).
    img = jnp.pad(images.astype(jnp.float32),
                  ((0, 0), (0, 0), (1, 1), (1, 1))).reshape(B, 4 * 6 * 6)
    img = img.astype(jnp.bfloat16)

    dt_in = jnp.concatenate(
        [end_dist, treasure_dist, treasure_status],
        axis=-1).astype(jnp.float32).astype(jnp.bfloat16)

    return fused_forward(pos_emb, img, prep["conv_mat"], prep["conv_b"],
                         prep["ln_cnn_g"], prep["ln_cnn_b"], dt_in,
                         prep["fc_dt_w"], prep["fc_dt_b"], prep["ln_dt_g"],
                         prep["ln_dt_b"])


# ------------------------- numpy reference (f32) ---------------------------- #

def _reference_forward(params, x, y, end_dist, treasure_dist, images,
                       treasure_status):
    p = {k: np.asarray(v, np.float32) for k, v in params.items()}
    x = np.asarray(x)
    y = np.asarray(y)
    B = x.shape[0]
    xe = p["x_emb"][x.reshape(B, -1)].reshape(B, -1)
    ye = p["y_emb"][y.reshape(B, -1)].reshape(B, -1)
    pos = np.concatenate([xe, ye], -1)

    img = np.asarray(images, np.float32)
    H = p["conv_w"].shape[0]
    imgp = np.pad(img, ((0, 0), (0, 0), (1, 1), (1, 1)))
    conv = np.zeros((B, H, 4, 4), np.float32)
    for oi in range(4):
        for oj in range(4):
            patch = imgp[:, :, oi:oi + 3, oj:oj + 3]
            conv[:, :, oi, oj] = (
                np.einsum("bcij,hcij->bh", patch, p["conv_w"]) + p["conv_b"])
    conv = np.maximum(conv, 0.0)
    pooled = conv.reshape(B, H, 2, 2, 2, 2).max(axis=(3, 5)).reshape(B, -1)

    def ln(z, g, b):
        m = z.mean(-1, keepdims=True)
        v = z.var(-1, keepdims=True)
        return (z - m) / np.sqrt(v + EPS) * g + b

    feat = ln(pooled, p["ln_cnn_g"], p["ln_cnn_b"])
    dist_info = np.concatenate(
        [np.asarray(end_dist, np.float32),
         np.asarray(treasure_dist, np.float32)], -1)
    d = np.maximum(dist_info @ p["fc_dist_w"] + p["fc_dist_b"], 0.0)
    d = ln(d, p["ln_dist_g"], p["ln_dist_b"])
    t = np.maximum(np.asarray(treasure_status, np.float32) @ p["fc_ts_w"]
                   + p["fc_ts_b"], 0.0)
    t = ln(t, p["ln_ts_g"], p["ln_ts_b"])
    return np.concatenate([pos, feat, d, t], -1)


# --------------------------------- main ------------------------------------- #

if __name__ == "__main__":
    key = jax.random.PRNGKey(0)
    pkey, dkey = jax.random.split(key)
    params = init_params(pkey)
    prep = prepare_params(params)

    B = 2
    ks = jax.random.split(dkey, 6)
    x = jax.random.randint(ks[0], (B, 1), 0, MAZE[0], dtype=jnp.int32)
    y = jax.random.randint(ks[1], (B, 1), 0, MAZE[1], dtype=jnp.int32)
    end_dist = jax.random.uniform(ks[2], (B, 1), jnp.float32)
    treasure_dist = jax.random.uniform(ks[3], (B, NUM_T), jnp.float32)
    images = jax.random.uniform(ks[4], (B, 4, 4, 4), jnp.float32)   # NCHW
    treasure_status = jax.random.bernoulli(ks[5], 0.5, (B, NUM_T)).astype(jnp.float32)

    out = shared_base_forward(prep, x, y, end_dist, treasure_dist, images,
                              treasure_status)
    out = jax.block_until_ready(out)

    assert out.shape == (B, 2 * EMB + 4 * HID + HID + HID), out.shape
    assert bool(jnp.all(jnp.isfinite(out)))

    ref = _reference_forward(params, x, y, end_dist, treasure_dist, images,
                             treasure_status)
    np.testing.assert_allclose(np.asarray(out), ref, rtol=5e-2, atol=5e-2)

    print("KERNEL_OK")
</pallas_src>

<mosaic_0001>
module attributes {stable_mosaic.version = 11 : i64} {
  func.func @shared_base_kernel(%arg0: i32, %arg1: memref<2x16xf32, #tpu.memory_space<vmem>>, %arg2: memref<2x144xbf16, #tpu.memory_space<vmem>>, %arg3: memref<144x512xbf16, #tpu.memory_space<vmem>>, %arg4: memref<1x128xf32, #tpu.memory_space<vmem>>, %arg5: memref<1x128xf32, #tpu.memory_space<vmem>>, %arg6: memref<1x128xf32, #tpu.memory_space<vmem>>, %arg7: memref<2x21xbf16, #tpu.memory_space<vmem>>, %arg8: memref<21x64xbf16, #tpu.memory_space<vmem>>, %arg9: memref<1x64xf32, #tpu.memory_space<vmem>>, %arg10: memref<1x64xf32, #tpu.memory_space<vmem>>, %arg11: memref<1x64xf32, #tpu.memory_space<vmem>>, %arg12: memref<2x208xf32, #tpu.memory_space<vmem>>) attributes {dimension_semantics = [#tpu.dimension_semantics<parallel>], iteration_bounds = array<i64: 1>, scalar_prefetch = 0 : i64, scratch_operands = 0 : i64, tpu.core_type = #tpu.core_type<tc>, window_params = [{transform_indices = @transform_0, window_bounds = array<i64: 2, 16>}, {transform_indices = @transform_1, window_bounds = array<i64: 2, 144>}, {pipeline_mode = #tpu.pipeline_mode<synchronous>, transform_indices = @transform_2, window_bounds = array<i64: 144, 512>}, {pipeline_mode = #tpu.pipeline_mode<synchronous>, transform_indices = @transform_3, window_bounds = array<i64: 1, 128>}, {pipeline_mode = #tpu.pipeline_mode<synchronous>, transform_indices = @transform_4, window_bounds = array<i64: 1, 128>}, {pipeline_mode = #tpu.pipeline_mode<synchronous>, transform_indices = @transform_5, window_bounds = array<i64: 1, 128>}, {transform_indices = @transform_6, window_bounds = array<i64: 2, 21>}, {pipeline_mode = #tpu.pipeline_mode<synchronous>, transform_indices = @transform_7, window_bounds = array<i64: 21, 64>}, {pipeline_mode = #tpu.pipeline_mode<synchronous>, transform_indices = @transform_8, window_bounds = array<i64: 1, 64>}, {pipeline_mode = #tpu.pipeline_mode<synchronous>, transform_indices = @transform_9, window_bounds = array<i64: 1, 64>}, {pipeline_mode = #tpu.pipeline_mode<synchronous>, transform_indices = @transform_10, window_bounds = array<i64: 1, 64>}, {transform_indices = @transform_11, window_bounds = array<i64: 2, 208>}]} {
    %c0 = arith.constant 0 : index
    %c0_0 = arith.constant 0 : index
    %0 = vector.load %arg2[%c0, %c0_0] : memref<2x144xbf16, #tpu.memory_space<vmem>>, vector<2x144xbf16>
    %c0_1 = arith.constant 0 : index
    %c0_2 = arith.constant 0 : index
    %1 = vector.load %arg3[%c0_1, %c0_2] : memref<144x512xbf16, #tpu.memory_space<vmem>>, vector<144x512xbf16>
    %cst = arith.constant dense<0.000000e+00> : vector<2x512xf32>
    %2 = tpu.matmul %0, %1, %cst {dimension_numbers = #tpu.dot_dimension_numbers<[1], [0], [0], [1], [0, 0, 1, 1], [], []>} : vector<2x144xbf16>, vector<144x512xbf16>, vector<2x512xf32> -> vector<2x512xf32>
    %3 = vector.extract_strided_slice %2 {offsets = [0, 0], sizes = [2, 128], strides = [1, 1]} : vector<2x512xf32> to vector<2x128xf32>
    %4 = vector.extract_strided_slice %2 {offsets = [0, 128], sizes = [2, 128], strides = [1, 1]} : vector<2x512xf32> to vector<2x128xf32>
    %5 = arith.maximumf %3, %4 : vector<2x128xf32>
    %6 = vector.extract_strided_slice %2 {offsets = [0, 256], sizes = [2, 128], strides = [1, 1]} : vector<2x512xf32> to vector<2x128xf32>
    %7 = vector.extract_strided_slice %2 {offsets = [0, 384], sizes = [2, 128], strides = [1, 1]} : vector<2x512xf32> to vector<2x128xf32>
    %8 = arith.maximumf %6, %7 : vector<2x128xf32>
    %9 = arith.maximumf %5, %8 : vector<2x128xf32>
    %c0_3 = arith.constant 0 : index
    %c0_4 = arith.constant 0 : index
    %10 = vector.load %arg4[%c0_3, %c0_4] : memref<1x128xf32, #tpu.memory_space<vmem>>, vector<1x128xf32>
    %11 = vector.broadcast %10 : vector<1x128xf32> to vector<2x128xf32>
    %12 = arith.addf %9, %11 : vector<2x128xf32>
    %cst_5 = arith.constant 0.000000e+00 : f32
    %13 = vector.broadcast %cst_5 : f32 to vector<2x128xf32>
    %14 = arith.maximumf %12, %13 : vector<2x128xf32>
    %cst_6 = arith.constant dense<0.000000e+00> : vector<2xf32>
    %15 = vector.multi_reduction <add>, %14, %cst_6 [1] : vector<2x128xf32> to vector<2xf32>
    %16 = vector.shape_cast %15 : vector<2xf32> to vector<2x1xf32>
    %cst_7 = arith.constant 1.280000e+02 : f32
    %17 = vector.broadcast %cst_7 : f32 to vector<2x1xf32>
    %18 = arith.divf %16, %17 : vector<2x1xf32>
    %19 = vector.broadcast %18 : vector<2x1xf32> to vector<2x128xf32>
    %20 = arith.subf %14, %19 : vector<2x128xf32>
    %21 = arith.mulf %20, %20 : vector<2x128xf32>
    %cst_8 = arith.constant dense<0.000000e+00> : vector<2xf32>
    %22 = vector.multi_reduction <add>, %21, %cst_8 [1] : vector<2x128xf32> to vector<2xf32>
    %23 = vector.shape_cast %22 : vector<2xf32> to vector<2x1xf32>
    %cst_9 = arith.constant 1.280000e+02 : f32
    %24 = vector.broadcast %cst_9 : f32 to vector<2x1xf32>
    %25 = arith.divf %23, %24 : vector<2x1xf32>
    %26 = vector.broadcast %18 : vector<2x1xf32> to vector<2x128xf32>
    %27 = arith.subf %14, %26 : vector<2x128xf32>
    %cst_10 = arith.constant 9.99999974E-6 : f32
    %28 = vector.broadcast %cst_10 : f32 to vector<2x1xf32>
    %29 = arith.addf %25, %28 : vector<2x1xf32>
    %30 = math.rsqrt %29 : vector<2x1xf32>
    %31 = vector.broadcast %30 : vector<2x1xf32> to vector<2x128xf32>
    %32 = arith.mulf %27, %31 : vector<2x128xf32>
    %c0_11 = arith.constant 0 : index
    %c0_12 = arith.constant 0 : index
    %33 = vector.load %arg5[%c0_11, %c0_12] : memref<1x128xf32, #tpu.memory_space<vmem>>, vector<1x128xf32>
    %34 = vector.broadcast %33 : vector<1x128xf32> to vector<2x128xf32>
    %35 = arith.mulf %32, %34 : vector<2x128xf32>
    %c0_13 = arith.constant 0 : index
    %c0_14 = arith.constant 0 : index
    %36 = vector.load %arg6[%c0_13, %c0_14] : memref<1x128xf32, #tpu.memory_space<vmem>>, vector<1x128xf32>
    %37 = vector.broadcast %36 : vector<1x128xf32> to vector<2x128xf32>
    %38 = arith.addf %35, %37 : vector<2x128xf32>
    %c0_15 = arith.constant 0 : index
    %c0_16 = arith.constant 0 : index
    %39 = vector.load %arg7[%c0_15, %c0_16] : memref<2x21xbf16, #tpu.memory_space<vmem>>, vector<2x21xbf16>
    %c0_17 = arith.constant 0 : index
    %c0_18 = arith.constant 0 : index
    %40 = vector.load %arg8[%c0_17, %c0_18] : memref<21x64xbf16, #tpu.memory_space<vmem>>, vector<21x64xbf16>
    %cst_19 = arith.constant dense<0.000000e+00> : vector<2x64xf32>
    %41 = tpu.matmul %39, %40, %cst_19 {dimension_numbers = #tpu.dot_dimension_numbers<[1], [0], [0], [1], [0, 0, 1, 1], [], []>} : vector<2x21xbf16>, vector<21x64xbf16>, vector<2x64xf32> -> vector<2x64xf32>
    %c0_20 = arith.constant 0 : index
    %c0_21 = arith.constant 0 : index
    %42 = vector.load %arg9[%c0_20, %c0_21] : memref<1x64xf32, #tpu.memory_space<vmem>>, vector<1x64xf32>
    %43 = vector.broadcast %42 : vector<1x64xf32> to vector<2x64xf32>
    %44 = arith.addf %41, %43 : vector<2x64xf32>
    %cst_22 = arith.constant 0.000000e+00 : f32
    %45 = vector.broadcast %cst_22 : f32 to vector<2x64xf32>
    %46 = arith.maximumf %44, %45 : vector<2x64xf32>
    %c0_23 = arith.constant 0 : index
    %c0_24 = arith.constant 0 : index
    %47 = vector.load %arg10[%c0_23, %c0_24] : memref<1x64xf32, #tpu.memory_space<vmem>>, vector<1x64xf32>
    %c0_25 = arith.constant 0 : index
    %c0_26 = arith.constant 0 : index
    %48 = vector.load %arg11[%c0_25, %c0_26] : memref<1x64xf32, #tpu.memory_space<vmem>>, vector<1x64xf32>
    %c0_27 = arith.constant 0 : index
    %c0_28 = arith.constant 0 : index
    %49 = vector.load %arg1[%c0_27, %c0_28] : memref<2x16xf32, #tpu.memory_space<vmem>>, vector<2x16xf32>
    %c0_29 = arith.constant 0 : index
    %c0_30 = arith.constant 0 : index
    %50 = vector.load %arg12[%c0_29, %c0_30] : memref<2x208xf32, #tpu.memory_space<vmem>>, vector<2x16xf32>
    tpu.vector_store %arg12[%c0_29, %c0_30], %49 {strides = array<i32>} : memref<2x208xf32, #tpu.memory_space<vmem>>, vector<2x16xf32>,
    %c0_31 = arith.constant 0 : index
    %c16 = arith.constant 16 : index
    %51 = vector.load %arg12[%c0_31, %c16] : memref<2x208xf32, #tpu.memory_space<vmem>>, vector<2x128xf32>
    tpu.vector_store %arg12[%c0_31, %c16], %38 {strides = array<i32>} : memref<2x208xf32, #tpu.memory_space<vmem>>, vector<2x128xf32>,
    %52 = vector.extract_strided_slice %46 {offsets = [0, 0], sizes = [2, 32], strides = [1, 1]} : vector<2x64xf32> to vector<2x32xf32>
    %cst_32 = arith.constant dense<0.000000e+00> : vector<2xf32>
    %53 = vector.multi_reduction <add>, %52, %cst_32 [1] : vector<2x32xf32> to vector<2xf32>
    %54 = vector.shape_cast %53 : vector<2xf32> to vector<2x1xf32>
    %cst_33 = arith.constant 3.200000e+01 : f32
    %55 = vector.broadcast %cst_33 : f32 to vector<2x1xf32>
    %56 = arith.divf %54, %55 : vector<2x1xf32>
    %57 = vector.broadcast %56 : vector<2x1xf32> to vector<2x32xf32>
    %58 = arith.subf %52, %57 : vector<2x32xf32>
    %59 = arith.mulf %58, %58 : vector<2x32xf32>
    %cst_34 = arith.constant dense<0.000000e+00> : vector<2xf32>
    %60 = vector.multi_reduction <add>, %59, %cst_34 [1] : vector<2x32xf32> to vector<2xf32>
    %61 = vector.shape_cast %60 : vector<2xf32> to vector<2x1xf32>
    %cst_35 = arith.constant 3.200000e+01 : f32
    %62 = vector.broadcast %cst_35 : f32 to vector<2x1xf32>
    %63 = arith.divf %61, %62 : vector<2x1xf32>
    %64 = vector.broadcast %56 : vector<2x1xf32> to vector<2x32xf32>
    %65 = arith.subf %52, %64 : vector<2x32xf32>
    %cst_36 = arith.constant 9.99999974E-6 : f32
    %66 = vector.broadcast %cst_36 : f32 to vector<2x1xf32>
    %67 = arith.addf %63, %66 : vector<2x1xf32>
    %68 = math.rsqrt %67 : vector<2x1xf32>
    %69 = vector.broadcast %68 : vector<2x1xf32> to vector<2x32xf32>
    %70 = arith.mulf %65, %69 : vector<2x32xf32>
    %71 = vector.extract_strided_slice %47 {offsets = [0, 0], sizes = [1, 32], strides = [1, 1]} : vector<1x64xf32> to vector<1x32xf32>
    %72 = vector.broadcast %71 : vector<1x32xf32> to vector<2x32xf32>
    %73 = arith.mulf %70, %72 : vector<2x32xf32>
    %74 = vector.extract_strided_slice %48 {offsets = [0, 0], sizes = [1, 32], strides = [1, 1]} : vector<1x64xf32> to vector<1x32xf32>
    %75 = vector.broadcast %74 : vector<1x32xf32> to vector<2x32xf32>
    %76 = arith.addf %73, %75 : vector<2x32xf32>
    %c0_37 = arith.constant 0 : index
    %c144 = arith.constant 144 : index
    %77 = vector.load %arg12[%c0_37, %c144] : memref<2x208xf32, #tpu.memory_space<vmem>>, vector<2x32xf32>
    tpu.vector_store %arg12[%c0_37, %c144], %76 {strides = array<i32>} : memref<2x208xf32, #tpu.memory_space<vmem>>, vector<2x32xf32>,
    %78 = vector.extract_strided_slice %46 {offsets = [0, 32], sizes = [2, 32], strides = [1, 1]} : vector<2x64xf32> to vector<2x32xf32>
    %cst_38 = arith.constant dense<0.000000e+00> : vector<2xf32>
    %79 = vector.multi_reduction <add>, %78, %cst_38 [1] : vector<2x32xf32> to vector<2xf32>
    %80 = vector.shape_cast %79 : vector<2xf32> to vector<2x1xf32>
    %cst_39 = arith.constant 3.200000e+01 : f32
    %81 = vector.broadcast %cst_39 : f32 to vector<2x1xf32>
    %82 = arith.divf %80, %81 : vector<2x1xf32>
    %83 = vector.broadcast %82 : vector<2x1xf32> to vector<2x32xf32>
    %84 = arith.subf %78, %83 : vector<2x32xf32>
    %85 = arith.mulf %84, %84 : vector<2x32xf32>
    %cst_40 = arith.constant dense<0.000000e+00> : vector<2xf32>
    %86 = vector.multi_reduction <add>, %85, %cst_40 [1] : vector<2x32xf32> to vector<2xf32>
    %87 = vector.shape_cast %86 : vector<2xf32> to vector<2x1xf32>
    %cst_41 = arith.constant 3.200000e+01 : f32
    %88 = vector.broadcast %cst_41 : f32 to vector<2x1xf32>
    %89 = arith.divf %87, %88 : vector<2x1xf32>
    %90 = vector.broadcast %82 : vector<2x1xf32> to vector<2x32xf32>
    %91 = arith.subf %78, %90 : vector<2x32xf32>
    %cst_42 = arith.constant 9.99999974E-6 : f32
    %92 = vector.broadcast %cst_42 : f32 to vector<2x1xf32>
    %93 = arith.addf %89, %92 : vector<2x1xf32>
    %94 = math.rsqrt %93 : vector<2x1xf32>
    %95 = vector.broadcast %94 : vector<2x1xf32> to vector<2x32xf32>
    %96 = arith.mulf %91, %95 : vector<2x32xf32>
    %97 = vector.extract_strided_slice %47 {offsets = [0, 32], sizes = [1, 32], strides = [1, 1]} : vector<1x64xf32> to vector<1x32xf32>
    %98 = vector.broadcast %97 : vector<1x32xf32> to vector<2x32xf32>
    %99 = arith.mulf %96, %98 : vector<2x32xf32>
    %100 = vector.extract_strided_slice %48 {offsets = [0, 32], sizes = [1, 32], strides = [1, 1]} : vector<1x64xf32> to vector<1x32xf32>
    %101 = vector.broadcast %100 : vector<1x32xf32> to vector<2x32xf32>
    %102 = arith.addf %99, %101 : vector<2x32xf32>
    %c0_43 = arith.constant 0 : index
    %c176 = arith.constant 176 : index
    %103 = vector.load %arg12[%c0_43, %c176] : memref<2x208xf32, #tpu.memory_space<vmem>>, vector<2x32xf32>
    tpu.vector_store %arg12[%c0_43, %c176], %102 {strides = array<i32>} : memref<2x208xf32, #tpu.memory_space<vmem>>, vector<2x32xf32>,
    return
  }
  func.func @transform_0(%arg0: i32) -> (i32, i32) {
    %c0_i32 = arith.constant 0 : i32
    %c0_i32_0 = arith.constant 0 : i32
    return %arg0, %c0_i32 : i32, i32
  }
  func.func @transform_1(%arg0: i32) -> (i32, i32) {
    %c0_i32 = arith.constant 0 : i32
    %c0_i32_0 = arith.constant 0 : i32
    return %arg0, %c0_i32 : i32, i32
  }
  func.func @transform_2(%arg0: i32) -> (i32, i32) {
    %c0_i32 = arith.constant 0 : i32
    %c0_i32_0 = arith.constant 0 : i32
    %c0_i32_1 = arith.constant 0 : i32
    return %c0_i32, %c0_i32_0 : i32, i32
  }
  func.func @transform_3(%arg0: i32) -> (i32, i32) {
    %c0_i32 = arith.constant 0 : i32
    %c0_i32_0 = arith.constant 0 : i32
    %c0_i32_1 = arith.constant 0 : i32
    return %c0_i32, %c0_i32_0 : i32, i32
  }
  func.func @transform_4(%arg0: i32) -> (i32, i32) {
    %c0_i32 = arith.constant 0 : i32
    %c0_i32_0 = arith.constant 0 : i32
    %c0_i32_1 = arith.constant 0 : i32
    return %c0_i32, %c0_i32_0 : i32, i32
  }
  func.func @transform_5(%arg0: i32) -> (i32, i32) {
    %c0_i32 = arith.constant 0 : i32
    %c0_i32_0 = arith.constant 0 : i32
    %c0_i32_1 = arith.constant 0 : i32
    return %c0_i32, %c0_i32_0 : i32, i32
  }
  func.func @transform_6(%arg0: i32) -> (i32, i32) {
    %c0_i32 = arith.constant 0 : i32
    %c0_i32_0 = arith.constant 0 : i32
    return %arg0, %c0_i32 : i32, i32
  }
  func.func @transform_7(%arg0: i32) -> (i32, i32) {
    %c0_i32 = arith.constant 0 : i32
    %c0_i32_0 = arith.constant 0 : i32
    %c0_i32_1 = arith.constant 0 : i32
    return %c0_i32, %c0_i32_0 : i32, i32
  }
  func.func @transform_8(%arg0: i32) -> (i32, i32) {
    %c0_i32 = arith.constant 0 : i32
    %c0_i32_0 = arith.constant 0 : i32
    %c0_i32_1 = arith.constant 0 : i32
    return %c0_i32, %c0_i32_0 : i32, i32
  }
  func.func @transform_9(%arg0: i32) -> (i32, i32) {
    %c0_i32 = arith.constant 0 : i32
    %c0_i32_0 = arith.constant 0 : i32
    %c0_i32_1 = arith.constant 0 : i32
    return %c0_i32, %c0_i32_0 : i32, i32
  }
  func.func @transform_10(%arg0: i32) -> (i32, i32) {
    %c0_i32 = arith.constant 0 : i32
    %c0_i32_0 = arith.constant 0 : i32
    %c0_i32_1 = arith.constant 0 : i32
    return %c0_i32, %c0_i32_0 : i32, i32
  }
  func.func @transform_11(%arg0: i32) -> (i32, i32) {
    %c0_i32 = arith.constant 0 : i32
    %c0_i32_0 = arith.constant 0 : i32
    return %arg0, %c0_i32 : i32, i32
  }
}

</mosaic_0001>

<llo_original>
// kernel: shared_base_forward.1
$region0: #{shared_base_forward.1}
  #allocation0 [shape = 'u32[]', space=smem, size = 0x4, offset = 0x4, fixed_abs, tag = 'smem constant byte address 0x4 - core index']
  #allocation1 [shape = 'u32[144,128]{1,0:T(1,128)}', space=vmem, size = 0x12000, scoped, tag = 'internal scratch']
  %s0 = inlined_call_operand.vmem [shape: f32[2,16], index: 0, kind: input, shape index: {}]
  %s1 = inlined_call_operand.vmem [shape: bf16[2,144], index: 1, kind: input, shape index: {}]
  %s2 = inlined_call_operand.vmem [shape: bf16[144,512], index: 2, kind: input, shape index: {}]
  %s3 = inlined_call_operand.vmem [shape: f32[1,128], index: 3, kind: input, shape index: {}]
  %s4 = inlined_call_operand.vmem [shape: f32[1,128], index: 4, kind: input, shape index: {}]
  %s5 = inlined_call_operand.vmem [shape: f32[1,128], index: 5, kind: input, shape index: {}]
  %s6 = inlined_call_operand.vmem [shape: bf16[2,21], index: 6, kind: input, shape index: {}]
  %s7 = inlined_call_operand.vmem [shape: bf16[21,64], index: 7, kind: input, shape index: {}]
  %s8 = inlined_call_operand.vmem [shape: f32[1,64], index: 8, kind: input, shape index: {}]
  %s9 = inlined_call_operand.vmem [shape: f32[1,64], index: 9, kind: input, shape index: {}]
  %s10 = inlined_call_operand.vmem [shape: f32[1,64], index: 10, kind: input, shape index: {}]
  %s11 = inlined_call_operand.hbm [shape: f32[2,208], index: 11, kind: output, shape index: {}]
  %s12 = sld [smem:[#allocation0]]
  $region54: #{shared_base_forward.1} parent=0
    _
  %s14 = ssub.s32 1, %s12
  %s15 = scalar_select 0, %s14, %s12
  $region1: #{shared_base_forward.1} parent=0
    #allocation2 [shape = 'u8[2048]{0}', space=vmem, size = 0x800, scoped, tag = 'output window, operand 0, single buffered']
    #allocation3 [shape = 's32[1]{0}', space=sflag, size = 0x4, scoped, tag = 'scoped memory for shared_base_forward.1']
    %16 = vsyncpa [#allocation3], 0
    // Predicated region
    $region2: #{shared_base_forward.1} parent=1 // pred_check
      _
    $region3: #{shared_base_forward.1} parent=1 // pred_check_branch
      %18 = sbr.rel (0) target = $region5
    $region4: #{shared_base_forward.1} parent=1 // pred_region
      _
    $region5: #{shared_base_forward.1} parent=1 // pred_fallthru
      _
    // Predicated region
    $region6: #{shared_base_forward.1} parent=1 // pred_check
      _
    $region7: #{shared_base_forward.1} parent=1 // pred_check_branch
      %20 = sbr.rel (0) target = $region9
    $region8: #{shared_base_forward.1} parent=1 // pred_region
      _
    $region9: #{shared_base_forward.1} parent=1 // pred_fallthru
      _
    // Predicated region
    $region10: #{shared_base_forward.1} parent=1 // pred_check
      _
    $region11: #{shared_base_forward.1} parent=1 // pred_check_branch
      %22 = sbr.rel (0) target = $region13
    $region12: #{shared_base_forward.1} parent=1 // pred_region
      _
    $region13: #{shared_base_forward.1} parent=1 // pred_fallthru
      _
    // Predicated region
    $region14: #{shared_base_forward.1} parent=1 // pred_check
      _
    $region15: #{shared_base_forward.1} parent=1 // pred_check_branch
      %24 = sbr.rel (0) target = $region17
    $region16: #{shared_base_forward.1} parent=1 // pred_region
      _
    $region17: #{shared_base_forward.1} parent=1 // pred_fallthru
      _
    // Predicated region
    $region18: #{shared_base_forward.1} parent=1 // pred_check
      _
    $region19: #{shared_base_forward.1} parent=1 // pred_check_branch
      %26 = sbr.rel (0) target = $region21
    $region20: #{shared_base_forward.1} parent=1 // pred_region
      _
    $region21: #{shared_base_forward.1} parent=1 // pred_fallthru
      _
    // Predicated region
    $region22: #{shared_base_forward.1} parent=1 // pred_check
      _
    $region23: #{shared_base_forward.1} parent=1 // pred_check_branch
      %28 = sbr.rel (0) target = $region25
    $region24: #{shared_base_forward.1} parent=1 // pred_region
      _
    $region25: #{shared_base_forward.1} parent=1 // pred_fallthru
      _
    // Predicated region
    $region26: #{shared_base_forward.1} parent=1 // pred_check
      _
    $region27: #{shared_base_forward.1} parent=1 // pred_check_branch
      %30 = sbr.rel (0) target = $region29
    $region28: #{shared_base_forward.1} parent=1 // pred_region
      _
    $region29: #{shared_base_forward.1} parent=1 // pred_fallthru
      _
    // Predicated region
    $region30: #{shared_base_forward.1} parent=1 // pred_check
      _
    $region31: #{shared_base_forward.1} parent=1 // pred_check_branch
      %32 = sbr.rel (0) target = $region33
    $region32: #{shared_base_forward.1} parent=1 // pred_region
      _
    $region33: #{shared_base_forward.1} parent=1 // pred_fallthru
      _
    // Predicated region
    $region34: #{shared_base_forward.1} parent=1 // pred_check
      _
    $region35: #{shared_base_forward.1} parent=1 // pred_check_branch
      %34 = sbr.rel (0) target = $region37
    $region36: #{shared_base_forward.1} parent=1 // pred_region
      _
    $region37: #{shared_base_forward.1} parent=1 // pred_fallthru
      _
    // Predicated region
    $region38: #{shared_base_forward.1} parent=1 // pred_check
      _
    $region39: #{shared_base_forward.1} parent=1 // pred_check_branch
      %36 = sbr.rel (0) target = $region41
    $region40: #{shared_base_forward.1} parent=1 // pred_region
      _
    $region41: #{shared_base_forward.1} parent=1 // pred_fallthru
      _
    // Predicated region
    $region42: #{shared_base_forward.1} parent=1 // pred_check
      _
    $region43: #{shared_base_forward.1} parent=1 // pred_check_branch
      %38 = sbr.rel (0) target = $region45
    $region44: #{shared_base_forward.1} parent=1 // pred_region
      _
    $region45: #{shared_base_forward.1} parent=1 // pred_fallthru
      _
    %v40 = vld [vmem:[%s1] sm:$0x3]
    %v41 = vld [vmem:[%s2] sm:$0xff]
    %v42 = vld [vmem:[%s2 + $0x8] sm:$0xff]
    %v43 = vld [vmem:[%s2 + $0x10] sm:$0xff]
    %v44 = vld [vmem:[%s2 + $0x18] sm:$0xff]
    %v45 = vld [vmem:[%s2 + $0x20] sm:$0xff]
    %v46 = vld [vmem:[%s2 + $0x28] sm:$0xff]
    %v47 = vld [vmem:[%s2 + $0x30] sm:$0xff]
    %v48 = vld [vmem:[%s2 + $0x38] sm:$0xff]
    %v49 = vld [vmem:[%s2 + $0x40] sm:$0xff]
    %v50 = vld [vmem:[%s2 + $0x48] sm:$0xff]
    %v51 = vld [vmem:[%s2 + $0x50] sm:$0xff]
    %v52 = vld [vmem:[%s2 + $0x58] sm:$0xff]
    %v53 = vld [vmem:[%s2 + $0x60] sm:$0xff]
    %v54 = vld [vmem:[%s2 + $0x68] sm:$0xff]
    %v55 = vld [vmem:[%s2 + $0x70] sm:$0xff]
    %v56 = vld [vmem:[%s2 + $0x78] sm:$0xff]
    %v57 = vld [vmem:[%s2 + $0x80] sm:$0xff]
    %v58 = vld [vmem:[%s2 + $0x88] sm:$0xff]
    %v59 = vld [vmem:[%s2 + $0x90] sm:$0xff]
    %v60 = vld [vmem:[%s2 + $0x98] sm:$0xff]
    %v61 = vld [vmem:[%s2 + $0xa0] sm:$0xff]
    %v62 = vld [vmem:[%s2 + $0xa8] sm:$0xff]
    %v63 = vld [vmem:[%s2 + $0xb0] sm:$0xff]
    %v64 = vld [vmem:[%s2 + $0xb8] sm:$0xff]
    %v65 = vld [vmem:[%s2 + $0xc0] sm:$0xff]
    %v66 = vld [vmem:[%s2 + $0xc8] sm:$0xff]
    %v67 = vld [vmem:[%s2 + $0xd0] sm:$0xff]
    %v68 = vld [vmem:[%s2 + $0xd8] sm:$0xff]
    %v69 = vld [vmem:[%s2 + $0xe0] sm:$0xff]
    %v70 = vld [vmem:[%s2 + $0xe8] sm:$0xff]
    %v71 = vld [vmem:[%s2 + $0xf0] sm:$0xff]
    %v72 = vld [vmem:[%s2 + $0xf8] sm:$0xff]
    %v73 = vld [vmem:[%s2 + $0x100] sm:$0xff]
    %v74 = vld [vmem:[%s2 + $0x108] sm:$0xff]
    %v75 = vld [vmem:[%s2 + $0x110] sm:$0xff]
    %v76 = vld [vmem:[%s2 + $0x118] sm:$0xff]
    %v79 = vunpack.c.l.s4 1966171168
    %v80 = vunpack.c.0.s8 %v79
    %v81 = vlaneseq
    %v82 = vshrl.u32 %v81, 7
    %v83 = vsub.s32 %v80, %v82
    %v84 = vrot.slane %v40, %v83
    %v85 = vcombine.high %v84, %v84
    %v87 = vunpack.c.l.s4 1966171168
    %v88 = vunpack.c.0.s8 %v87
    %v89 = vlaneseq
    %v90 = vshrl.u32 %v89, 7
    %v91 = vsub.s32 %v88, %v90
    %v92 = vrot.slane %v84, %v91
    %v94 = vunpack.c.l.s4 1966171168
    %v95 = vunpack.c.0.s8 %v94
    %v96 = vlaneseq
    %v97 = vshrl.u32 %v96, 7
    %v98 = vsub.s32 %v95, %v97
    %v99 = vrot.slane %v85, %v98
    %v137 = vunpack.c.l.b16 %v41
    %v138 = vunpack.c.h.b16 %v41
    %v139 = vunpack.c.l.b16 %v42
    %v140 = vunpack.c.h.b16 %v42
    %v141 = vunpack.c.l.b16 %v43
    %v142 = vunpack.c.h.b16 %v43
    %v143 = vunpack.c.l.b16 %v44
    %v144 = vunpack.c.h.b16 %v44
    %v145 = vunpack.c.l.b16 %v45
    %v146 = vunpack.c.h.b16 %v45
    %v147 = vunpack.c.l.b16 %v46
    %v148 = vunpack.c.h.b16 %v46
    %v149 = vunpack.c.l.b16 %v47
    %v150 = vunpack.c.h.b16 %v47
    %v151 = vunpack.c.l.b16 %v48
    %v152 = vunpack.c.h.b16 %v48
    %v153 = vunpack.c.l.b16 %v49
    %v154 = vunpack.c.h.b16 %v49
    %v155 = vunpack.c.l.b16 %v50
    %v156 = vunpack.c.h.b16 %v50
    %v157 = vunpack.c.l.b16 %v51
    %v158 = vunpack.c.h.b16 %v51
    %v159 = vunpack.c.l.b16 %v52
    %v160 = vunpack.c.h.b16 %v52
    %v161 = vunpack.c.l.b16 %v53
    %v162 = vunpack.c.h.b16 %v53
    %v163 = vunpack.c.l.b16 %v54
    %v164 = vunpack.c.h.b16 %v54
    %v165 = vunpack.c.l.b16 %v55
    %v166 = vunpack.c.h.b16 %v55
    %v167 = vunpack.c.l.b16 %v56
    %v168 = vunpack.c.h.b16 %v56
    %v169 = vunpack.c.l.b16 %v57
    %v170 = vunpack.c.h.b16 %v57
    %v171 = vunpack.c.l.b16 %v58
    %v172 = vunpack.c.h.b16 %v58
    %v173 = vunpack.c.l.b16 %v59
    %v174 = vunpack.c.h.b16 %v59
    %v175 = vunpack.c.l.b16 %v60
    %v176 = vunpack.c.h.b16 %v60
    %v177 = vunpack.c.l.b16 %v61
    %v178 = vunpack.c.h.b16 %v61
    %v179 = vunpack.c.l.b16 %v62
    %v180 = vunpack.c.h.b16 %v62
    %v181 = vunpack.c.l.b16 %v63
    %v182 = vunpack.c.h.b16 %v63
    %v183 = vunpack.c.l.b16 %v64
    %v184 = vunpack.c.h.b16 %v64
    %v185 = vunpack.c.l.b16 %v65
    %v186 = vunpack.c.h.b16 %v65
    %v187 = vunpack.c.l.b16 %v66
    %v188 = vunpack.c.h.b16 %v66
    %v189 = vunpack.c.l.b16 %v67
    %v190 = vunpack.c.h.b16 %v67
    %v191 = vunpack.c.l.b16 %v68
    %v192 = vunpack.c.h.b16 %v68
    %v193 = vunpack.c.l.b16 %v69
    %v194 = vunpack.c.h.b16 %v69
    %v195 = vunpack.c.l.b16 %v70
    %v196 = vunpack.c.h.b16 %v70
    %v197 = vunpack.c.l.b16 %v71
    %v198 = vunpack.c.h.b16 %v71
    %v199 = vunpack.c.l.b16 %v72
    %v200 = vunpack.c.h.b16 %v72
    %v201 = vunpack.c.l.b16 %v73
    %v202 = vunpack.c.h.b16 %v73
    %v203 = vunpack.c.l.b16 %v74
    %v204 = vunpack.c.h.b16 %v74
    %v205 = vunpack.c.l.b16 %v75
    %v206 = vunpack.c.h.b16 %v75
    %v207 = vunpack.c.l.b16 %v76
    %v208 = vunpack.c.h.b16 %v76
    %v209 = vpack.c.b16 %v141, %v137
    %v210 = vpack.c.b16 %v142, %v138
    %v211 = vpack.c.b16 %v143, %v139
    %v212 = vpack.c.b16 %v144, %v140
    %v213 = vpack.c.b16 %v149, %v145
    %v214 = vpack.c.b16 %v150, %v146
    %v215 = vpack.c.b16 %v151, %v147
    %v216 = vpack.c.b16 %v152, %v148
    %v217 = vpack.c.b16 %v157, %v153
    %v218 = vpack.c.b16 %v158, %v154
    %v219 = vpack.c.b16 %v159, %v155
    %v220 = vpack.c.b16 %v160, %v156
    %v221 = vpack.c.b16 %v165, %v161
    %v222 = vpack.c.b16 %v166, %v162
    %v223 = vpack.c.b16 %v167, %v163
    %v224 = vpack.c.b16 %v168, %v164
    %v225 = vpack.c.b16 %v173, %v169
    %v226 = vpack.c.b16 %v174, %v170
    %v227 = vpack.c.b16 %v175, %v171
    %v228 = vpack.c.b16 %v176, %v172
    %v229 = vpack.c.b16 %v181, %v177
    %v230 = vpack.c.b16 %v182, %v178
    %v231 = vpack.c.b16 %v183, %v179
    %v232 = vpack.c.b16 %v184, %v180
    %v233 = vpack.c.b16 %v189, %v185
    %v234 = vpack.c.b16 %v190, %v186
    %v235 = vpack.c.b16 %v191, %v187
    %v236 = vpack.c.b16 %v192, %v188
    %v237 = vpack.c.b16 %v197, %v193
    %v238 = vpack.c.b16 %v198, %v194
    %v239 = vpack.c.b16 %v199, %v195
    %v240 = vpack.c.b16 %v200, %v196
    %v241 = vpack.c.b16 %v205, %v201
    %v242 = vpack.c.b16 %v206, %v202
    %v243 = vpack.c.b16 %v207, %v203
    %v244 = vpack.c.b16 %v208, %v204
    %vm281 = vcmask 130048
    %v283 = vsel %vm281, %v99, 0
    %285 = vmatprep.subr.bf16.mxu0 %v238
    %286 = vmatpush1.bf16.msra.mxu0 %v237
    %287 = vmatprep.subr.bf16.mxu0 %v234
    %288 = vmatpush1.bf16.msra.mxu0 %v233
    %289 = vmatprep.subr.bf16.mxu0 %v230
    %290 = vmatpush1.bf16.msra.mxu0 %v229
    %291 = vmatprep.subr.bf16.mxu0 %v226
    %292 = vmatpush1.bf16.msra.mxu0 %v225
    %293 = vmatprep.subr.bf16.mxu0 %v222
    %294 = vmatpush1.bf16.msra.mxu0 %v221
    %295 = vmatprep.subr.bf16.mxu0 %v218
    %296 = vmatpush1.bf16.msra.mxu0 %v217
    %297 = vmatprep.subr.bf16.mxu0 %v214
    %298 = vmatpush1.bf16.msra.mxu0 %v213
    %299 = vmatprep.subr.bf16.mxu0 %v210
    %300 = vmatpush1.bf16.msra.mxu0 %v209
    %301 = vmatprep.subr.bf16.mxu0 0
    %302 = vmatpush2.bf16.msra.mxu0 0
    %303 = vmatprep.subr.bf16.mxu0 0
    %304 = vmatpush2.bf16.msra.mxu0 0
    %305 = vmatprep.subr.bf16.mxu0 0
    %306 = vmatpush2.bf16.msra.mxu0 0
    %307 = vmatprep.subr.bf16.mxu0 0
    %308 = vmatpush2.bf16.msra.mxu0 0
    %309 = vmatprep.subr.bf16.mxu0 0
    %310 = vmatpush2.bf16.msra.mxu0 0
    %311 = vmatprep.subr.bf16.mxu0 0
    %312 = vmatpush2.bf16.msra.mxu0 0
    %313 = vmatprep.subr.bf16.mxu0 0
    %314 = vmatpush2.bf16.msra.mxu0 0
    %315 = vmatprep.subr.bf16.mxu0 %v242
    %316 = vmatpush2.bf16.msra.mxu0 %v241
    %317 = vmatprep.mubr.bf16.mxu0 %v283
    %318 = vmatmul.mubr.bf16.gmra.mxu0 %v92
    %v319 = vpop.f32.mrf.mxu0
    %v320 = vadd.f32 0.0, %v319
    %v321 = vpop.f32.mrf.mxu0
    %v322 = vadd.f32 0.0, %v321
    %v323 = vpop.f32.mrf.mxu0
    %v324 = vpop.f32.mrf.mxu0
    %325 = vdwg.mxu0
    %326 = vmatprep.subr.bf16.mxu0 %v240
    %327 = vmatpush1.bf16.msra.mxu0 %v239
    %328 = vmatprep.subr.bf16.mxu0 %v236
    %329 = vmatpush1.bf16.msra.mxu0 %v235
    %330 = vmatprep.subr.bf16.mxu0 %v232
    %331 = vmatpush1.bf16.msra.mxu0 %v231
    %332 = vmatprep.subr.bf16.mxu0 %v228
    %333 = vmatpush1.bf16.msra.mxu0 %v227
    %334 = vmatprep.subr.bf16.mxu0 %v224
    %335 = vmatpush1.bf16.msra.mxu0 %v223
    %336 = vmatprep.subr.bf16.mxu0 %v220
    %337 = vmatpush1.bf16.msra.mxu0 %v219
    %338 = vmatprep.subr.bf16.mxu0 %v216
    %339 = vmatpush1.bf16.msra.mxu0 %v215
    %340 = vmatprep.subr.bf16.mxu0 %v212
    %341 = vmatpush1.bf16.msra.mxu0 %v211
    %342 = vmatprep.subr.bf16.mxu0 0
    %343 = vmatpush2.bf16.msra.mxu0 0
    %344 = vmatprep.subr.bf16.mxu0 0
    %345 = vmatpush2.bf16.msra.mxu0 0
    %346 = vmatprep.subr.bf16.mxu0 0
    %347 = vmatpush2.bf16.msra.mxu0 0
    %348 = vmatprep.subr.bf16.mxu0 0
    %349 = vmatpush2.bf16.msra.mxu0 0
    %350 = vmatprep.subr.bf16.mxu0 0
    %351 = vmatpush2.bf16.msra.mxu0 0
    %352 = vmatprep.subr.bf16.mxu0 0
    %353 = vmatpush2.bf16.msra.mxu0 0
    %354 = vmatprep.subr.bf16.mxu0 0
    %355 = vmatpush2.bf16.msra.mxu0 0
    %356 = vmatprep.subr.bf16.mxu0 %v244
    %357 = vmatpush2.bf16.msra.mxu0 %v243
    %358 = vmatprep.mubr.bf16.mxu0 %v283
    %359 = vmatmul.mubr.bf16.gmra.mxu0 %v92
    %v360 = vpop.f32.mrf.mxu0
    %v361 = vadd.f32 0.0, %v360
    %v362 = vpop.f32.mrf.mxu0
    %v363 = vadd.f32 0.0, %v362
    %v364 = vpop.f32.mrf.mxu0
    %v365 = vpop.f32.mrf.mxu0
    %366 = vdwg.mxu0
    %v367 = vmax.f32 %v320, %v322
    %v368 = vmax.f32 %v361, %v363
    %v369 = vmax.f32 %v367, %v368
    %v370 = vld [vmem:[%s3] sm:$0x1]
    %v372 = vlaneseq
    %v373 = vshrl.u32 %v372, 7
    %v374 = vsub.s32 0, %v373
    %v375 = vrot.slane %v370, %v374
    %v377 = vadd.f32 %v369, %v375
    %v378 = vmax.f32 %v377, 0.0
    %vm379 = vcmask 1041408
    %v380 = vsel %vm379, %v378, 0.0
    %381 = vadd.xlane.f32.xlu0 %v380
    %v382 = vpop.xlane.xlu0 %381
    %v383 = vrcp.pop 128.0
    %v384 = vmul.f32 %v382, %v383
    %v385 = vsub.f32 %v378, %v384
    %v386 = vmul.f32 %v385, %v385
    %v387 = vsel %vm379, %v386, 0.0
    %388 = vadd.xlane.f32.xlu0 %v387
    %v389 = vpop.xlane.xlu0 %388
    %v390 = vmul.f32 %v389, %v383
    %v391 = vadd.f32 %v390, 1e-05
    %v392 = vrsqrt.pop %v391
    %v393 = vmul.f32 %v385, %v392
    %v394 = vld [vmem:[%s4] sm:$0x1]
    %v396 = vlaneseq
    %v397 = vshrl.u32 %v396, 7
    %v398 = vsub.s32 0, %v397
    %v399 = vrot.slane %v394, %v398
    %v401 = vmul.f32 %v393, %v399
    %v402 = vld [vmem:[%s5] sm:$0x1]
    %v404 = vlaneseq
    %v405 = vshrl.u32 %v404, 7
    %v406 = vsub.s32 0, %v405
    %v407 = vrot.slane %v402, %v406
    %v409 = vadd.f32 %v401, %v407
    %v410 = vld [vmem:[%s6] sm:$0x1]
    %v411 = vld [vmem:[%s7] sm:$0xf]
    %v412 = vld [vmem:[%s7 + $0x4] sm:$0xf]
    %v413 = vld [vmem:[%s7 + $0x8] sm:$0x7]
    %v414 = vld [vmem:[%s8] sm:$0x1]
    %v416 = vlaneseq
    %v417 = vshrl.u32 %v416, 7
    %v418 = vsub.s32 0, %v417
    %v419 = vrot.slane %v414, %v418
    %v424 = vunpack.c.l.b16 %v411
    %v425 = vunpack.c.l.b16 %v412
    %v426 = vunpack.c.l.b16 %v413
    %v427 = vpack.c.b16 %v425, %v424
    %v428 = vpack.c.b16 %v426, %v426
    %vm430 = vcmask 171008
    %v432 = vsel %vm430, %v410, 0
    %vm434 = vcmask 1042432
    %v435 = vsel %vm379, 4294967295, 65535
    %v436 = vsel %vm434, %v435, 0
    %v438 = vand.u32 %v428, %v436
    %440 = vmatprep.subr.bf16.mxu0 0
    %441 = vmatpush1.bf16.msra.mxu0 0
    %442 = vmatprep.subr.bf16.mxu0 0
    %443 = vmatpush1.bf16.msra.mxu0 0
    %444 = vmatprep.subr.bf16.mxu0 0
    %445 = vmatpush1.bf16.msra.mxu0 0
    %446 = vmatprep.subr.bf16.mxu0 0
    %447 = vmatpush1.bf16.msra.mxu0 0
    %448 = vmatprep.subr.bf16.mxu0 0
    %449 = vmatpush1.bf16.msra.mxu0 0
    %450 = vmatprep.subr.bf16.mxu0 0
    %451 = vmatpush1.bf16.msra.mxu0 0
    %452 = vmatprep.subr.bf16.mxu0 0
    %453 = vmatpush1.bf16.msra.mxu0 %v438
    %454 = vmatprep.subr.bf16.mxu0 0
    %455 = vmatpush1.bf16.msra.mxu0 %v427
    %456 = vmatprep.subr.bf16.mxu0 0
    %457 = vmatpush2.bf16.msra.mxu0 0
    %458 = vmatprep.subr.bf16.mxu0 0
    %459 = vmatpush2.bf16.msra.mxu0 0
    %460 = vmatprep.subr.bf16.mxu0 0
    %461 = vmatpush2.bf16.msra.mxu0 0
    %462 = vmatprep.subr.bf16.mxu0 0
    %463 = vmatpush2.bf16.msra.mxu0 0
    %464 = vmatprep.subr.bf16.mxu0 0
    %465 = vmatpush2.bf16.msra.mxu0 0
    %466 = vmatprep.subr.bf16.mxu0 0
    %467 = vmatpush2.bf16.msra.mxu0 0
    %468 = vmatprep.subr.bf16.mxu0 0
    %469 = vmatpush2.bf16.msra.mxu0 0
    %470 = vmatprep.subr.bf16.mxu0 0
    %471 = vmatpush2.bf16.msra.mxu0 0
    %472 = vmatprep.mubr.bf16.mxu0 0
    %473 = vmatmul.mubr.bf16.gmra.mxu0 %v432
    %v474 = vpop.f32.mrf.mxu0
    %v475 = vadd.f32 %v419, %v474
    %v476 = vpop.f32.mrf.mxu0
    %v477 = vpop.f32.mrf.mxu0
    %v478 = vpop.f32.mrf.mxu0
    %479 = vdwg.mxu0
    %v480 = vmax.f32 %v475, 0.0
    %v481 = vld [vmem:[%s9] sm:$0x1]
    %v482 = vld [vmem:[%s10] sm:$0x1]
    %v483 = vld [vmem:[%s0] sm:$0x3]
    %vm484 = vcmask 123904
    %485 = vst.msk [vmem:[#allocation2] sm:$0x3] %vm484, %v483
    %v488 = vunpack.c.l.s4 1983009808
    %v489 = vunpack.c.0.s8 %v488
    %v490 = vlaneseq
    %v491 = vshrl.u32 %v490, 7
    %v492 = vsub.s32 %v489, %v491
    %v493 = vrot.slane %v409, %v492
    %494 = vrot.lane.b32.xlu0 %v493, 16
    %v495 = vpop.permute.xlu0 %494
    %v496 = vrot.slane %v495, 6
    %v497 = vsel %vm281, %v496, %v495
    %vm499 = vcmask 1041536
    %vm500 = vcmask 125954
    %vm501 = vmor %vm500, %vm499
    %502 = vst.msk [vmem:[#allocation2] sm:$0xf] %vm501, %v497
    %vm503 = vcmask 254976
    %v504 = vsel %vm503, %v480, 0.0
    %505 = vadd.xlane.f32.xlu0 %v504
    %v506 = vpop.xlane.xlu0 %505
    %v507 = vrcp.pop 32.0
    %v508 = vmul.f32 %v506, %v507
    %v509 = vsub.f32 %v480, %v508
    %v510 = vmul.f32 %v509, %v509
    %v511 = vsel %vm503, %v510, 0.0
    %512 = vadd.xlane.f32.xlu0 %v511
    %v513 = vpop.xlane.xlu0 %512
    %v514 = vmul.f32 %v513, %v507
    %v515 = vadd.f32 %v514, 1e-05
    %v516 = vrsqrt.pop %v515
    %v517 = vmul.f32 %v509, %v516
    %v519 = vlaneseq
    %v520 = vshrl.u32 %v519, 7
    %v521 = vsub.s32 0, %v520
    %v522 = vrot.slane %v481, %v521
    %v524 = vmul.f32 %v517, %v522
    %v526 = vlaneseq
    %v527 = vshrl.u32 %v526, 7
    %v528 = vsub.s32 0, %v527
    %v529 = vrot.slane %v482, %v528
    %v531 = vadd.f32 %v524, %v529
    %v534 = vunpack.c.l.s4 1983009808
    %v535 = vunpack.c.0.s8 %v534
    %v536 = vlaneseq
    %v537 = vshrl.u32 %v536, 7
    %v538 = vsub.s32 %v535, %v537
    %v539 = vrot.slane %v531, %v538
    %540 = vrot.lane.b32.xlu0 %v539, 16
    %v541 = vpop.permute.xlu0 %540
    %vm543 = vcmask 386176
    %544 = vst.msk [vmem:[#allocation2 + $0x2] sm:$0x3] %vm543, %v541
    %546 = vrot.lane.b32.xlu0 %v480, 96
    %v547 = vpop.permute.xlu0 %546
    %v549 = vsel %vm503, %v547, 0.0
    %550 = vadd.xlane.f32.xlu0 %v549
    %v551 = vpop.xlane.xlu0 %550
    %v552 = vmul.f32 %v551, %v507
    %v553 = vsub.f32 %v480, %v552
    %v554 = vmul.f32 %v553, %v553
    %556 = vrot.lane.b32.xlu0 %v554, 96
    %v557 = vpop.permute.xlu0 %556
    %v559 = vsel %vm503, %v557, 0.0
    %560 = vadd.xlane.f32.xlu0 %v559
    %v561 = vpop.xlane.xlu0 %560
    %v562 = vmul.f32 %v561, %v507
    %v563 = vadd.f32 %v562, 1e-05
    %v564 = vrsqrt.pop %v563
    %v565 = vmul.f32 %v553, %v564
    %v566 = vmul.f32 %v565, %v522
    %v567 = vadd.f32 %v566, %v529
    %v570 = vunpack.c.l.s4 1983009808
    %v571 = vunpack.c.0.s8 %v570
    %v572 = vlaneseq
    %v573 = vshrl.u32 %v572, 7
    %v574 = vsub.s32 %v571, %v573
    %v575 = vrot.slane %v567, %v574
    %576 = vrot.lane.b32.xlu0 %v575, 16
    %v577 = vpop.permute.xlu0 %576
    %vm579 = vcmask 648576
    %580 = vst.msk [vmem:[#allocation2 + $0x2] sm:$0x3] %vm579, %v577
    // Predicated region
    $region46: #{shared_base_forward.1} parent=1 // pred_check
      _
    $region47: #{shared_base_forward.1} parent=1 // pred_check_branch
      %582 = sbr.rel (0) target = $region49
    $region48: #{shared_base_forward.1} parent=1 // pred_region
      %s584 = ssub.s32 64, 64
      %585 = vsyncadd [#allocation3], %s584
      %s587 = sshll.u32 [#allocation2], 4
      %s588 = int_to_ptr.vmem [resolvable:$true] %s587
      %590 = dma.vmem_to_hbm [thread:$0]  %s588, 64, %s11, [#allocation3]
    $region49: #{shared_base_forward.1} parent=1 // pred_fallthru
      _
    // Predicated region
    $region50: #{shared_base_forward.1} parent=1 // pred_check
      _
    $region51: #{shared_base_forward.1} parent=1 // pred_check_branch
      %592 = sbr.rel (0) target = $region53
    $region52: #{shared_base_forward.1} parent=1 // pred_region
      %593 = dma.done [#allocation3], 64
    $region53: #{shared_base_forward.1} parent=1 // pred_fallthru
      _
    %594 = vsyncpa [#allocation3], 1

</llo_original>
